<compile_context>
chip_gen: v7x
topology: tpu7x:2x2x1
jax: 0.10.0
libtpu: 0.0.40
codegen_flags: <defaults>
</compile_context>

<pallas_src>
import math

import jax
import jax.numpy as jnp
from jax import lax
from jax.experimental import pallas as pl
from jax.experimental.pallas import tpu as pltpu

# ---- small synthetic config (consistent with the module's __init__) ----
BATCH = 2
SEQ = 8
D_MODEL = 32
NUM_HEADS = 4
D_FF = 64
ROPE_THETA = 10000.0
EPS = 1e-5

BS = BATCH * SEQ                 # batch folded into the sublane (row) axis
DK = D_MODEL // NUM_HEADS
DK2 = DK // 2
HS = NUM_HEADS * SEQ             # rows of the per-batch block-diagonal K / V
SCALE = 1.0 / math.sqrt(DK)
NEG_BIG = -1e30                  # finite large-negative causal bias (no -inf/NaN traps)

# q @ k^T without materializing a transpose (RHS contracted on its last dim)
NT_DIMS = (((1,), (1,)), ((), ()))

# -------- packed-operand layout (shared by wrapper and kernel) --------
# wbig : (D, 2*D_FF + 5*D) = [ w1T|w3T (g2-folded) | wq|wk|wv|wq_rot|wk_rot
#                              (g1-, scale-, rope-swap-folded) ]
COL_W13 = 0
COL_FUSE = 2 * D_FF
WBIG_COLS = 2 * D_FF + 5 * D_MODEL
# aux : (AUX_ROWS, D) row blocks; every offset is a multiple of 8 (sublane tile)
ROW_COS = 0                      # (BS, D)    RoPE cos, tiled over batch & heads
ROW_SIN = BS                     # (BS, D)    RoPE sin
ROW_BIAS = 2 * BS                # (SEQ, HS)  causal additive bias, tiled over heads
ROW_WO = ROW_BIAS + SEQ          # (D, D)     output projection
ROW_BDKV = ROW_WO + D_MODEL      # (HS, D)    block-diag mask for K / V build
ROW_BDSUM = ROW_BDKV + HS        # (HS, HS)   block-diag ones for segmented row-sum
ROW_W2 = ROW_BDSUM + HS          # (D_FF, D)  FFN down projection
AUX_ROWS = ROW_W2 + D_FF


def _rmsnorm(x):
    # gain is pre-folded into the rows of the following matmul's weights
    return x * lax.rsqrt(jnp.mean(x * x, axis=-1, keepdims=True) + EPS)


def transformer_block_kernel(x_ref, wbig_ref, aux_ref, o_ref):
    x = x_ref[...]                                         # (BS, D)

    # static views into the two packed slabs (one DMA each)
    w13 = wbig_ref[:, COL_W13:COL_W13 + 2 * D_FF]          # (D, 2*D_FF)
    wfuse = wbig_ref[:, COL_FUSE:COL_FUSE + 5 * D_MODEL]   # (D, 5*D)
    cosf = aux_ref[ROW_COS:ROW_COS + BS, :]                # (BS, D)
    sinf = aux_ref[ROW_SIN:ROW_SIN + BS, :]                # (BS, D)
    bias = aux_ref[ROW_BIAS:ROW_BIAS + SEQ, :]             # (SEQ, HS)
    woT = aux_ref[ROW_WO:ROW_WO + D_MODEL, :]              # (D, D)
    bd_kv = aux_ref[ROW_BDKV:ROW_BDKV + HS, :]             # (HS, D)
    bd_sum = aux_ref[ROW_BDSUM:ROW_BDSUM + HS, :]          # (HS, HS)
    w2T = aux_ref[ROW_W2:ROW_W2 + D_FF, :]                 # (D_FF, D)

    # ---------------- attention sub-block ----------------
    h = _rmsnorm(x)
    # one fused projection: [q | k | v | q_rot | k_rot]; RMSNorm gain, softmax
    # scale and the RoPE rotate-half signed permutation are folded into weights.
    proj = jnp.dot(h, wfuse, preferred_element_type=jnp.float32)   # (BS, 5D)
    q = proj[:, 0 * D_MODEL:1 * D_MODEL]
    k = proj[:, 1 * D_MODEL:2 * D_MODEL]
    v = proj[:, 2 * D_MODEL:3 * D_MODEL]
    q_rot = proj[:, 3 * D_MODEL:4 * D_MODEL]
    k_rot = proj[:, 4 * D_MODEL:5 * D_MODEL]
    # full-width RoPE, pure VPU (no lane slices per head, no extra matmuls)
    qr = q * cosf + q_rot * sinf
    kr = k * cosf + k_rot * sinf

    # Per-batch attention: all NUM_HEADS heads are handled by 3 MXU matmuls,
    # using block-diagonal K / V built via a sublane tile + mask (no transposes,
    # no masked scratch stores).
    o_parts = []
    for b in range(BATCH):
        r0 = b * SEQ
        qb = qr[r0:r0 + SEQ, :]                            # (SEQ, D)
        kb = kr[r0:r0 + SEQ, :]
        vb = v[r0:r0 + SEQ, :]
        kbd = jnp.concatenate([kb] * NUM_HEADS, axis=0) * bd_kv    # (HS, D)
        vbd = jnp.concatenate([vb] * NUM_HEADS, axis=0) * bd_kv    # (HS, D)
        # all heads' causal scores in one pass: column block h = q_h @ k_h^T
        s = lax.dot_general(qb, kbd, NT_DIMS,
                            preferred_element_type=jnp.float32) + bias  # (SEQ, HS)
        # exact per-head (segmented) max for softmax stability
        m = jnp.concatenate(
            [jnp.broadcast_to(
                jnp.max(s[:, hd * SEQ:(hd + 1) * SEQ], axis=-1, keepdims=True),
                (SEQ, SEQ)) for hd in range(NUM_HEADS)], axis=-1)
        e = jnp.exp(s - m)
        # segmented row-sum broadcast across each head block (block-diag ones)
        l = jnp.dot(e, bd_sum, preferred_element_type=jnp.float32)
        p = e / l                                          # exact divide (VALU has slack)
        # all heads' P @ V in one pass
        o_parts.append(jnp.dot(p, vbd, preferred_element_type=jnp.float32))

    o_all = jnp.concatenate(o_parts, axis=0)               # (BS, D), sublane concat
    x1 = x + jnp.dot(o_all, woT, preferred_element_type=jnp.float32)

    # ---------------- feed-forward sub-block (SwiGLU) ----------------
    h2 = _rmsnorm(x1)
    ug = jnp.dot(h2, w13, preferred_element_type=jnp.float32)       # (BS, 2*D_FF)
    a = ug[:, :D_FF]
    g = ug[:, D_FF:]
    ff = jnp.dot(a * jax.nn.sigmoid(a) * g, w2T,
                 preferred_element_type=jnp.float32)

    o_ref[...] = x1 + ff


def transformer_block(x, g1, wq, wk, wv, wo, g2, w1, w3, w2):
    """Weights are in PyTorch (out_features, in_features) layout."""
    B, S, D = x.shape
    assert (B, S, D) == (BATCH, SEQ, D_MODEL)
    f32 = jnp.float32

    # (in, out) layouts so the in-kernel hot path is plain `h @ W`
    wqT, wkT, wvT, woT = wq.T, wk.T, wv.T, wo.T
    w1T, w3T, w2T = w1.T, w3.T, w2.T

    # RoPE rotate-half as an exact signed column permutation folded into Wq/Wk:
    #   rope(t) = t*cos + t_rot*sin,  t_rot[2i] = -t[2i+1],  t_rot[2i+1] = t[2i]
    col = jnp.arange(D)
    loc = col % DK
    src = jnp.where(loc % 2 == 0, col + 1, col - 1)
    sgn = jnp.where(loc % 2 == 0, -1.0, 1.0).astype(f32)
    wqT_s = wqT * SCALE                                  # fold 1/sqrt(dk) into Wq
    wqT_rot = wqT_s[:, src] * sgn[None, :]
    wkT_rot = wkT[:, src] * sgn[None, :]

    # fused projection slab; RMSNorm gains fold into the weight rows
    wfuse = jnp.concatenate([wqT_s, wkT, wvT, wqT_rot, wkT_rot], axis=1)
    wfuse = wfuse * g1[:, None]                          # (D, 5D)
    w13 = jnp.concatenate([w1T, w3T], axis=1) * g2[:, None]        # (D, 2*D_FF)
    wbig = jnp.concatenate([w13, wfuse], axis=1).astype(f32)       # (D, WBIG_COLS)

    # RoPE tables (interleaved layout, matching the unpermuted weights),
    # tiled over batch (rows) and heads (cols): (BS, D)
    inv_freq = ROPE_THETA ** (-(2.0 * jnp.arange(DK2, dtype=f32)) / DK)
    ang = jnp.arange(S, dtype=f32)[:, None] * inv_freq[None, :]    # (S, DK2)
    cosf = jnp.tile(jnp.repeat(jnp.cos(ang), 2, axis=-1), (BATCH, NUM_HEADS))
    sinf = jnp.tile(jnp.repeat(jnp.sin(ang), 2, axis=-1), (BATCH, NUM_HEADS))

    # causal additive bias, tiled over the head blocks: (SEQ, HS)
    row = jnp.arange(S)[:, None]
    colk = jnp.arange(S)[None, :]
    bias_t = jnp.tile(jnp.where(colk <= row, 0.0, NEG_BIG).astype(f32),
                      (1, NUM_HEADS))

    # block-diagonal helpers for the batched per-head attention
    r_idx = jnp.arange(HS)
    bd_kv = (r_idx[:, None] // SEQ == jnp.arange(D)[None, :] // DK).astype(f32)
    bd_sum = (r_idx[:, None] // SEQ == r_idx[None, :] // SEQ).astype(f32)

    # pack everything (·, D)-shaped into one aux slab -> a single DMA
    aux = jnp.zeros((AUX_ROWS, D), f32)
    aux = aux.at[ROW_COS:ROW_COS + BS].set(cosf)
    aux = aux.at[ROW_SIN:ROW_SIN + BS].set(sinf)
    aux = aux.at[ROW_BIAS:ROW_BIAS + SEQ].set(bias_t)
    aux = aux.at[ROW_WO:ROW_WO + D].set(woT.astype(f32))
    aux = aux.at[ROW_BDKV:ROW_BDKV + HS].set(bd_kv)
    aux = aux.at[ROW_BDSUM:ROW_BDSUM + HS].set(bd_sum)
    aux = aux.at[ROW_W2:ROW_W2 + D_FF].set(w2T.astype(f32))

    x2d = x.reshape(BS, D).astype(f32)

    flops = (2 * BS * D * 5 * D                                   # fused projection
             + BATCH * (2 * SEQ * HS * D                          # scores
                        + 2 * SEQ * HS * HS                       # segmented row-sum
                        + 2 * SEQ * HS * D)                       # P @ V
             + 2 * BS * D * D                                     # Wo
             + 2 * BS * D * (2 * D_FF)                            # W1|W3
             + 2 * BS * D_FF * D)                                 # W2
    cost = pl.CostEstimate(
        flops=flops,
        transcendentals=BATCH * SEQ * HS + BS * D_FF + 2 * BS,
        bytes_accessed=4 * (BS * D + D * WBIG_COLS + AUX_ROWS * D + BS * D))

    operands = (x2d, wbig, aux)
    out2d = pl.pallas_call(
        transformer_block_kernel,
        out_shape=jax.ShapeDtypeStruct((BS, D), jnp.float32),
        # single fused step, batch folded into rows; everything resident (<70 KiB)
        grid=(1,),
        in_specs=[pl.BlockSpec(op.shape, lambda i: (0, 0)) for op in operands],
        out_specs=pl.BlockSpec((BS, D), lambda i: (0, 0)),
        compiler_params=pltpu.CompilerParams(
            dimension_semantics=("arbitrary",)),
        cost_estimate=cost,
    )(*operands)

    return out2d.reshape(B, S, D)


# ------------- pure-JAX reference (interleaved RoPE, unfused) -------------
def reference(x, g1, wq, wk, wv, wo, g2, w1, w3, w2):
    def rms(v_, g_):
        return v_ * lax.rsqrt(jnp.mean(v_ * v_, -1, keepdims=True) + EPS) * g_

    B, S, D = x.shape
    h = rms(x, g1)
    q = (h @ wq.T).reshape(B, S, NUM_HEADS, DK)
    k = (h @ wk.T).reshape(B, S, NUM_HEADS, DK)
    v = (h @ wv.T).reshape(B, S, NUM_HEADS, DK)

    inv_freq = ROPE_THETA ** (-(2.0 * jnp.arange(DK2, dtype=jnp.float32)) / DK)
    ang = jnp.arange(S, dtype=jnp.float32)[:, None] * inv_freq[None, :]
    c = jnp.cos(ang)[None, :, None, :]
    s = jnp.sin(ang)[None, :, None, :]

    def rope(t):
        te, to = t[..., 0::2], t[..., 1::2]
        re = te * c - to * s
        ro = te * s + to * c
        return jnp.stack([re, ro], axis=-1).reshape(t.shape)

    q, k = rope(q), rope(k)
    scores = jnp.einsum("bshd,bthd->bhst", q, k) * SCALE
    mask = jnp.tril(jnp.ones((S, S), bool))
    scores = jnp.where(mask, scores, -jnp.inf)
    p = jax.nn.softmax(scores, axis=-1)
    o = jnp.einsum("bhst,bthd->bshd", p, v).reshape(B, S, D)
    x1 = x + o @ wo.T

    h2 = rms(x1, g2)
    a = h2 @ w1.T
    b = h2 @ w3.T
    return x1 + (a * jax.nn.sigmoid(a) * b) @ w2.T


if __name__ == "__main__":
    key = jax.random.PRNGKey(0)
    ks = jax.random.split(key, 10)

    x = jax.random.normal(ks[0], (BATCH, SEQ, D_MODEL), jnp.float32)

    init = 0.05
    wq = init * jax.random.normal(ks[1], (D_MODEL, D_MODEL), jnp.float32)
    wk = init * jax.random.normal(ks[2], (D_MODEL, D_MODEL), jnp.float32)
    wv = init * jax.random.normal(ks[3], (D_MODEL, D_MODEL), jnp.float32)
    wo = init * jax.random.normal(ks[4], (D_MODEL, D_MODEL), jnp.float32)
    w1 = init * jax.random.normal(ks[5], (D_FF, D_MODEL), jnp.float32)
    w3 = init * jax.random.normal(ks[6], (D_FF, D_MODEL), jnp.float32)
    w2 = init * jax.random.normal(ks[7], (D_MODEL, D_FF), jnp.float32)
    g1 = 1.0 + 0.1 * jax.random.normal(ks[8], (D_MODEL,), jnp.float32)
    g2 = 1.0 + 0.1 * jax.random.normal(ks[9], (D_MODEL,), jnp.float32)

    out = jax.jit(transformer_block)(x, g1, wq, wk, wv, wo, g2, w1, w3, w2)
    out = jax.block_until_ready(out)

    ref = reference(x, g1, wq, wk, wv, wo, g2, w1, w3, w2)
    # Softmax now uses an exact divide (approx reciprocal removed); the remaining
    # tolerance only covers default-precision MXU f32 rounding-order differences
    # between the Pallas kernel and XLA's reference path.
    assert jnp.allclose(out, ref, rtol=5e-3, atol=5e-3), "mismatch vs reference"

    print("KERNEL_OK")
</pallas_src>

<mosaic_0001>
module attributes {stable_mosaic.version = 11 : i64} {
  func.func @transformer_block_kernel(%arg0: i32, %arg1: memref<16x32xf32, #tpu.memory_space<vmem>>, %arg2: memref<32x288xf32, #tpu.memory_space<vmem>>, %arg3: memref<200x32xf32, #tpu.memory_space<vmem>>, %arg4: memref<16x32xf32, #tpu.memory_space<vmem>>) attributes {dimension_semantics = [#tpu.dimension_semantics<arbitrary>], iteration_bounds = array<i64: 1>, scalar_prefetch = 0 : i64, scratch_operands = 0 : i64, tpu.core_type = #tpu.core_type<tc>, window_params = [{pipeline_mode = #tpu.pipeline_mode<synchronous>, transform_indices = @transform_0, window_bounds = array<i64: 16, 32>}, {pipeline_mode = #tpu.pipeline_mode<synchronous>, transform_indices = @transform_1, window_bounds = array<i64: 32, 288>}, {pipeline_mode = #tpu.pipeline_mode<synchronous>, transform_indices = @transform_2, window_bounds = array<i64: 200, 32>}, {pipeline_mode = #tpu.pipeline_mode<synchronous>, transform_indices = @transform_3, window_bounds = array<i64: 16, 32>}]} {
    %c0 = arith.constant 0 : index
    %c0_0 = arith.constant 0 : index
    %0 = vector.load %arg1[%c0, %c0_0] : memref<16x32xf32, #tpu.memory_space<vmem>>, vector<16x32xf32>
    %c0_1 = arith.constant 0 : index
    %c0_2 = arith.constant 0 : index
    %1 = vector.load %arg2[%c0_1, %c0_2] : memref<32x288xf32, #tpu.memory_space<vmem>>, vector<32x128xf32>
    %c0_3 = arith.constant 0 : index
    %c128 = arith.constant 128 : index
    %2 = vector.load %arg2[%c0_3, %c128] : memref<32x288xf32, #tpu.memory_space<vmem>>, vector<32x160xf32>
    %c0_4 = arith.constant 0 : index
    %c0_5 = arith.constant 0 : index
    %3 = vector.load %arg3[%c0_4, %c0_5] : memref<200x32xf32, #tpu.memory_space<vmem>>, vector<16x32xf32>
    %c16 = arith.constant 16 : index
    %c0_6 = arith.constant 0 : index
    %4 = vector.load %arg3[%c16, %c0_6] : memref<200x32xf32, #tpu.memory_space<vmem>>, vector<16x32xf32>
    %c32 = arith.constant 32 : index
    %c0_7 = arith.constant 0 : index
    %5 = vector.load %arg3[%c32, %c0_7] : memref<200x32xf32, #tpu.memory_space<vmem>>, vector<8x32xf32>
    %c40 = arith.constant 40 : index
    %c0_8 = arith.constant 0 : index
    %6 = vector.load %arg3[%c40, %c0_8] : memref<200x32xf32, #tpu.memory_space<vmem>>, vector<32x32xf32>
    %c72 = arith.constant 72 : index
    %c0_9 = arith.constant 0 : index
    %7 = vector.load %arg3[%c72, %c0_9] : memref<200x32xf32, #tpu.memory_space<vmem>>, vector<32x32xf32>
    %c104 = arith.constant 104 : index
    %c0_10 = arith.constant 0 : index
    %8 = vector.load %arg3[%c104, %c0_10] : memref<200x32xf32, #tpu.memory_space<vmem>>, vector<32x32xf32>
    %c136 = arith.constant 136 : index
    %c0_11 = arith.constant 0 : index
    %9 = vector.load %arg3[%c136, %c0_11] : memref<200x32xf32, #tpu.memory_space<vmem>>, vector<64x32xf32>
    %10 = arith.mulf %0, %0 : vector<16x32xf32>
    %cst = arith.constant dense<0.000000e+00> : vector<16xf32>
    %11 = vector.multi_reduction <add>, %10, %cst [1] : vector<16x32xf32> to vector<16xf32>
    %12 = vector.shape_cast %11 : vector<16xf32> to vector<16x1xf32>
    %cst_12 = arith.constant 3.200000e+01 : f32
    %13 = vector.broadcast %cst_12 : f32 to vector<16x1xf32>
    %14 = arith.divf %12, %13 : vector<16x1xf32>
    %cst_13 = arith.constant 9.99999974E-6 : f32
    %15 = vector.broadcast %cst_13 : f32 to vector<16x1xf32>
    %16 = arith.addf %14, %15 : vector<16x1xf32>
    %17 = math.rsqrt %16 : vector<16x1xf32>
    %18 = vector.broadcast %17 : vector<16x1xf32> to vector<16x32xf32>
    %19 = arith.mulf %0, %18 : vector<16x32xf32>
    %cst_14 = arith.constant dense<0.000000e+00> : vector<16x160xf32>
    %20 = tpu.matmul %19, %2, %cst_14 {dimension_numbers = #tpu.dot_dimension_numbers<[1], [0], [0], [1], [0, 0, 1, 1], [], []>} : vector<16x32xf32>, vector<32x160xf32>, vector<16x160xf32> -> vector<16x160xf32>
    %21 = vector.extract_strided_slice %20 {offsets = [0, 0], sizes = [16, 32], strides = [1, 1]} : vector<16x160xf32> to vector<16x32xf32>
    %22 = vector.extract_strided_slice %20 {offsets = [0, 32], sizes = [16, 32], strides = [1, 1]} : vector<16x160xf32> to vector<16x32xf32>
    %23 = vector.extract_strided_slice %20 {offsets = [0, 64], sizes = [16, 32], strides = [1, 1]} : vector<16x160xf32> to vector<16x32xf32>
    %24 = vector.extract_strided_slice %20 {offsets = [0, 96], sizes = [16, 32], strides = [1, 1]} : vector<16x160xf32> to vector<16x32xf32>
    %25 = vector.extract_strided_slice %20 {offsets = [0, 128], sizes = [16, 32], strides = [1, 1]} : vector<16x160xf32> to vector<16x32xf32>
    %26 = arith.mulf %21, %3 : vector<16x32xf32>
    %27 = arith.mulf %24, %4 : vector<16x32xf32>
    %28 = arith.addf %26, %27 : vector<16x32xf32>
    %29 = arith.mulf %22, %3 : vector<16x32xf32>
    %30 = arith.mulf %25, %4 : vector<16x32xf32>
    %31 = arith.addf %29, %30 : vector<16x32xf32>
    %32 = vector.extract_strided_slice %28 {offsets = [0, 0], sizes = [8, 32], strides = [1, 1]} : vector<16x32xf32> to vector<8x32xf32>
    %33 = vector.extract_strided_slice %31 {offsets = [0, 0], sizes = [8, 32], strides = [1, 1]} : vector<16x32xf32> to vector<8x32xf32>
    %34 = vector.extract_strided_slice %23 {offsets = [0, 0], sizes = [8, 32], strides = [1, 1]} : vector<16x32xf32> to vector<8x32xf32>
    %35 = tpu.concatenate %33, %33, %33, %33 in 0 : vector<8x32xf32>, vector<8x32xf32>, vector<8x32xf32>, vector<8x32xf32> -> vector<32x32xf32>
    %36 = arith.mulf %35, %7 : vector<32x32xf32>
    %37 = tpu.concatenate %34, %34, %34, %34 in 0 : vector<8x32xf32>, vector<8x32xf32>, vector<8x32xf32>, vector<8x32xf32> -> vector<32x32xf32>
    %38 = arith.mulf %37, %7 : vector<32x32xf32>
    %cst_15 = arith.constant dense<0.000000e+00> : vector<8x32xf32>
    %39 = tpu.matmul %32, %36, %cst_15 {dimension_numbers = #tpu.dot_dimension_numbers<[1], [1], [0], [0], [0, 0, 1, 0], [], []>} : vector<8x32xf32>, vector<32x32xf32>, vector<8x32xf32> -> vector<8x32xf32>
    %40 = arith.addf %39, %5 : vector<8x32xf32>
    %41 = vector.extract_strided_slice %40 {offsets = [0, 0], sizes = [8, 8], strides = [1, 1]} : vector<8x32xf32> to vector<8x8xf32>
    %cst_16 = arith.constant dense<0xFF800000> : vector<8xf32>
    %42 = vector.multi_reduction <maximumf>, %41, %cst_16 [1] : vector<8x8xf32> to vector<8xf32>
    %43 = vector.shape_cast %42 : vector<8xf32> to vector<8x1xf32>
    %44 = vector.shape_cast %43 : vector<8x1xf32> to vector<8x1xf32>
    %45 = vector.broadcast %44 : vector<8x1xf32> to vector<8x8xf32>
    %46 = vector.extract_strided_slice %40 {offsets = [0, 8], sizes = [8, 8], strides = [1, 1]} : vector<8x32xf32> to vector<8x8xf32>
    %cst_17 = arith.constant dense<0xFF800000> : vector<8xf32>
    %47 = vector.multi_reduction <maximumf>, %46, %cst_17 [1] : vector<8x8xf32> to vector<8xf32>
    %48 = vector.shape_cast %47 : vector<8xf32> to vector<8x1xf32>
    %49 = vector.shape_cast %48 : vector<8x1xf32> to vector<8x1xf32>
    %50 = vector.broadcast %49 : vector<8x1xf32> to vector<8x8xf32>
    %51 = vector.extract_strided_slice %40 {offsets = [0, 16], sizes = [8, 8], strides = [1, 1]} : vector<8x32xf32> to vector<8x8xf32>
    %cst_18 = arith.constant dense<0xFF800000> : vector<8xf32>
    %52 = vector.multi_reduction <maximumf>, %51, %cst_18 [1] : vector<8x8xf32> to vector<8xf32>
    %53 = vector.shape_cast %52 : vector<8xf32> to vector<8x1xf32>
    %54 = vector.shape_cast %53 : vector<8x1xf32> to vector<8x1xf32>
    %55 = vector.broadcast %54 : vector<8x1xf32> to vector<8x8xf32>
    %56 = vector.extract_strided_slice %40 {offsets = [0, 24], sizes = [8, 8], strides = [1, 1]} : vector<8x32xf32> to vector<8x8xf32>
    %cst_19 = arith.constant dense<0xFF800000> : vector<8xf32>
    %57 = vector.multi_reduction <maximumf>, %56, %cst_19 [1] : vector<8x8xf32> to vector<8xf32>
    %58 = vector.shape_cast %57 : vector<8xf32> to vector<8x1xf32>
    %59 = vector.shape_cast %58 : vector<8x1xf32> to vector<8x1xf32>
    %60 = vector.broadcast %59 : vector<8x1xf32> to vector<8x8xf32>
    %61 = tpu.concatenate %45, %50, %55, %60 in 1 : vector<8x8xf32>, vector<8x8xf32>, vector<8x8xf32>, vector<8x8xf32> -> vector<8x32xf32>
    %62 = arith.subf %40, %61 : vector<8x32xf32>
    %63 = math.exp %62 : vector<8x32xf32>
    %cst_20 = arith.constant dense<0.000000e+00> : vector<8x32xf32>
    %64 = tpu.matmul %63, %8, %cst_20 {dimension_numbers = #tpu.dot_dimension_numbers<[1], [0], [0], [1], [0, 0, 1, 1], [], []>} : vector<8x32xf32>, vector<32x32xf32>, vector<8x32xf32> -> vector<8x32xf32>
    %65 = arith.divf %63, %64 : vector<8x32xf32>
    %cst_21 = arith.constant dense<0.000000e+00> : vector<8x32xf32>
    %66 = tpu.matmul %65, %38, %cst_21 {dimension_numbers = #tpu.dot_dimension_numbers<[1], [0], [0], [1], [0, 0, 1, 1], [], []>} : vector<8x32xf32>, vector<32x32xf32>, vector<8x32xf32> -> vector<8x32xf32>
    %67 = vector.extract_strided_slice %28 {offsets = [8, 0], sizes = [8, 32], strides = [1, 1]} : vector<16x32xf32> to vector<8x32xf32>
    %68 = vector.extract_strided_slice %31 {offsets = [8, 0], sizes = [8, 32], strides = [1, 1]} : vector<16x32xf32> to vector<8x32xf32>
    %69 = vector.extract_strided_slice %23 {offsets = [8, 0], sizes = [8, 32], strides = [1, 1]} : vector<16x32xf32> to vector<8x32xf32>
    %70 = tpu.concatenate %68, %68, %68, %68 in 0 : vector<8x32xf32>, vector<8x32xf32>, vector<8x32xf32>, vector<8x32xf32> -> vector<32x32xf32>
    %71 = arith.mulf %70, %7 : vector<32x32xf32>
    %72 = tpu.concatenate %69, %69, %69, %69 in 0 : vector<8x32xf32>, vector<8x32xf32>, vector<8x32xf32>, vector<8x32xf32> -> vector<32x32xf32>
    %73 = arith.mulf %72, %7 : vector<32x32xf32>
    %cst_22 = arith.constant dense<0.000000e+00> : vector<8x32xf32>
    %74 = tpu.matmul %67, %71, %cst_22 {dimension_numbers = #tpu.dot_dimension_numbers<[1], [1], [0], [0], [0, 0, 1, 0], [], []>} : vector<8x32xf32>, vector<32x32xf32>, vector<8x32xf32> -> vector<8x32xf32>
    %75 = arith.addf %74, %5 : vector<8x32xf32>
    %76 = vector.extract_strided_slice %75 {offsets = [0, 0], sizes = [8, 8], strides = [1, 1]} : vector<8x32xf32> to vector<8x8xf32>
    %cst_23 = arith.constant dense<0xFF800000> : vector<8xf32>
    %77 = vector.multi_reduction <maximumf>, %76, %cst_23 [1] : vector<8x8xf32> to vector<8xf32>
    %78 = vector.shape_cast %77 : vector<8xf32> to vector<8x1xf32>
    %79 = vector.shape_cast %78 : vector<8x1xf32> to vector<8x1xf32>
    %80 = vector.broadcast %79 : vector<8x1xf32> to vector<8x8xf32>
    %81 = vector.extract_strided_slice %75 {offsets = [0, 8], sizes = [8, 8], strides = [1, 1]} : vector<8x32xf32> to vector<8x8xf32>
    %cst_24 = arith.constant dense<0xFF800000> : vector<8xf32>
    %82 = vector.multi_reduction <maximumf>, %81, %cst_24 [1] : vector<8x8xf32> to vector<8xf32>
    %83 = vector.shape_cast %82 : vector<8xf32> to vector<8x1xf32>
    %84 = vector.shape_cast %83 : vector<8x1xf32> to vector<8x1xf32>
    %85 = vector.broadcast %84 : vector<8x1xf32> to vector<8x8xf32>
    %86 = vector.extract_strided_slice %75 {offsets = [0, 16], sizes = [8, 8], strides = [1, 1]} : vector<8x32xf32> to vector<8x8xf32>
    %cst_25 = arith.constant dense<0xFF800000> : vector<8xf32>
    %87 = vector.multi_reduction <maximumf>, %86, %cst_25 [1] : vector<8x8xf32> to vector<8xf32>
    %88 = vector.shape_cast %87 : vector<8xf32> to vector<8x1xf32>
    %89 = vector.shape_cast %88 : vector<8x1xf32> to vector<8x1xf32>
    %90 = vector.broadcast %89 : vector<8x1xf32> to vector<8x8xf32>
    %91 = vector.extract_strided_slice %75 {offsets = [0, 24], sizes = [8, 8], strides = [1, 1]} : vector<8x32xf32> to vector<8x8xf32>
    %cst_26 = arith.constant dense<0xFF800000> : vector<8xf32>
    %92 = vector.multi_reduction <maximumf>, %91, %cst_26 [1] : vector<8x8xf32> to vector<8xf32>
    %93 = vector.shape_cast %92 : vector<8xf32> to vector<8x1xf32>
    %94 = vector.shape_cast %93 : vector<8x1xf32> to vector<8x1xf32>
    %95 = vector.broadcast %94 : vector<8x1xf32> to vector<8x8xf32>
    %96 = tpu.concatenate %80, %85, %90, %95 in 1 : vector<8x8xf32>, vector<8x8xf32>, vector<8x8xf32>, vector<8x8xf32> -> vector<8x32xf32>
    %97 = arith.subf %75, %96 : vector<8x32xf32>
    %98 = math.exp %97 : vector<8x32xf32>
    %cst_27 = arith.constant dense<0.000000e+00> : vector<8x32xf32>
    %99 = tpu.matmul %98, %8, %cst_27 {dimension_numbers = #tpu.dot_dimension_numbers<[1], [0], [0], [1], [0, 0, 1, 1], [], []>} : vector<8x32xf32>, vector<32x32xf32>, vector<8x32xf32> -> vector<8x32xf32>
    %100 = arith.divf %98, %99 : vector<8x32xf32>
    %cst_28 = arith.constant dense<0.000000e+00> : vector<8x32xf32>
    %101 = tpu.matmul %100, %73, %cst_28 {dimension_numbers = #tpu.dot_dimension_numbers<[1], [0], [0], [1], [0, 0, 1, 1], [], []>} : vector<8x32xf32>, vector<32x32xf32>, vector<8x32xf32> -> vector<8x32xf32>
    %102 = tpu.concatenate %66, %101 in 0 : vector<8x32xf32>, vector<8x32xf32> -> vector<16x32xf32>
    %cst_29 = arith.constant dense<0.000000e+00> : vector<16x32xf32>
    %103 = tpu.matmul %102, %6, %cst_29 {dimension_numbers = #tpu.dot_dimension_numbers<[1], [0], [0], [1], [0, 0, 1, 1], [], []>} : vector<16x32xf32>, vector<32x32xf32>, vector<16x32xf32> -> vector<16x32xf32>
    %104 = arith.addf %0, %103 : vector<16x32xf32>
    %105 = arith.mulf %104, %104 : vector<16x32xf32>
    %cst_30 = arith.constant dense<0.000000e+00> : vector<16xf32>
    %106 = vector.multi_reduction <add>, %105, %cst_30 [1] : vector<16x32xf32> to vector<16xf32>
    %107 = vector.shape_cast %106 : vector<16xf32> to vector<16x1xf32>
    %cst_31 = arith.constant 3.200000e+01 : f32
    %108 = vector.broadcast %cst_31 : f32 to vector<16x1xf32>
    %109 = arith.divf %107, %108 : vector<16x1xf32>
    %cst_32 = arith.constant 9.99999974E-6 : f32
    %110 = vector.broadcast %cst_32 : f32 to vector<16x1xf32>
    %111 = arith.addf %109, %110 : vector<16x1xf32>
    %112 = math.rsqrt %111 : vector<16x1xf32>
    %113 = vector.broadcast %112 : vector<16x1xf32> to vector<16x32xf32>
    %114 = arith.mulf %104, %113 : vector<16x32xf32>
    %cst_33 = arith.constant dense<0.000000e+00> : vector<16x128xf32>
    %115 = tpu.matmul %114, %1, %cst_33 {dimension_numbers = #tpu.dot_dimension_numbers<[1], [0], [0], [1], [0, 0, 1, 1], [], []>} : vector<16x32xf32>, vector<32x128xf32>, vector<16x128xf32> -> vector<16x128xf32>
    %116 = vector.extract_strided_slice %115 {offsets = [0, 0], sizes = [16, 64], strides = [1, 1]} : vector<16x128xf32> to vector<16x64xf32>
    %117 = vector.extract_strided_slice %115 {offsets = [0, 64], sizes = [16, 64], strides = [1, 1]} : vector<16x128xf32> to vector<16x64xf32>
    %118 = arith.negf %116 : vector<16x64xf32>
    %119 = math.exp %118 : vector<16x64xf32>
    %cst_34 = arith.constant 1.000000e+00 : f32
    %120 = vector.broadcast %cst_34 : f32 to vector<16x64xf32>
    %121 = arith.addf %120, %119 : vector<16x64xf32>
    %122 = arith.divf %120, %121 : vector<16x64xf32>
    %123 = arith.mulf %116, %122 : vector<16x64xf32>
    %124 = arith.mulf %123, %117 : vector<16x64xf32>
    %cst_35 = arith.constant dense<0.000000e+00> : vector<16x32xf32>
    %125 = tpu.matmul %124, %9, %cst_35 {dimension_numbers = #tpu.dot_dimension_numbers<[1], [0], [0], [1], [0, 0, 1, 1], [], []>} : vector<16x64xf32>, vector<64x32xf32>, vector<16x32xf32> -> vector<16x32xf32>
    %126 = arith.addf %104, %125 : vector<16x32xf32>
    %c0_36 = arith.constant 0 : index
    %c0_37 = arith.constant 0 : index
    %127 = vector.load %arg4[%c0_36, %c0_37] : memref<16x32xf32, #tpu.memory_space<vmem>>, vector<16x32xf32>
    tpu.vector_store %arg4[%c0_36, %c0_37], %126 {strides = array<i32>} : memref<16x32xf32, #tpu.memory_space<vmem>>, vector<16x32xf32>,
    return
  }
  func.func @transform_0(%arg0: i32) -> (i32, i32) {
    %c0_i32 = arith.constant 0 : i32
    %c0_i32_0 = arith.constant 0 : i32
    %c0_i32_1 = arith.constant 0 : i32
    return %c0_i32, %c0_i32_0 : i32, i32
  }
  func.func @transform_1(%arg0: i32) -> (i32, i32) {
    %c0_i32 = arith.constant 0 : i32
    %c0_i32_0 = arith.constant 0 : i32
    %c0_i32_1 = arith.constant 0 : i32
    return %c0_i32, %c0_i32_0 : i32, i32
  }
  func.func @transform_2(%arg0: i32) -> (i32, i32) {
    %c0_i32 = arith.constant 0 : i32
    %c0_i32_0 = arith.constant 0 : i32
    %c0_i32_1 = arith.constant 0 : i32
    return %c0_i32, %c0_i32_0 : i32, i32
  }
  func.func @transform_3(%arg0: i32) -> (i32, i32) {
    %c0_i32 = arith.constant 0 : i32
    %c0_i32_0 = arith.constant 0 : i32
    %c0_i32_1 = arith.constant 0 : i32
    return %c0_i32, %c0_i32_0 : i32, i32
  }
}

</mosaic_0001>

<llo_original>
// kernel: tile.15
$region0: #{tile.15}
  #allocation0 [shape = 's32[1]{0}', space=sflag, size = 0x4, scoped, tag = 'scoped memory for tile.15']
  %s0 = inlined_call_operand.vmem [shape: f32[8,8], index: 0, kind: input, shape index: {}]
  %s1 = inlined_call_operand.vmem [shape: f32[2,8,4,8], index: 1, kind: output, shape index: {}]
  // Predicated region
  $region2: #{tile.15} parent=0 // pred_check
    _
  $region3: #{tile.15} parent=0 // pred_check_branch
    %3 = sbr.rel (0) target = $region5
  $region4: #{tile.15} parent=0 // pred_region
    _
  $region5: #{tile.15} parent=0 // pred_fallthru
    _
  %v4 = vld [vmem:[%s0] ss:$0 sm:$0xff]
  %5 = vst [vmem:[%s1] sm:$0xf] %v4
  %s6 = scalar_lea.vmem %s1, 32
  %7 = vst [vmem:[%s6] sm:$0xf] %v4
  %s8 = scalar_lea.vmem %s0, 1
  %v9 = vld [vmem:[%s8] ss:$0 sm:$0xff]
  %s10 = scalar_lea.vmem %s1, 4
  %11 = vst [vmem:[%s10] sm:$0xf] %v9
  %s12 = scalar_lea.vmem %s1, 36
  %13 = vst [vmem:[%s12] sm:$0xf] %v9
  %s14 = scalar_lea.vmem %s0, 2
  %v15 = vld [vmem:[%s14] ss:$0 sm:$0xff]
  %s16 = scalar_lea.vmem %s1, 8
  %17 = vst [vmem:[%s16] sm:$0xf] %v15
  %s18 = scalar_lea.vmem %s1, 40
  %19 = vst [vmem:[%s18] sm:$0xf] %v15
  %s20 = scalar_lea.vmem %s0, 3
  %v21 = vld [vmem:[%s20] ss:$0 sm:$0xff]
  %s22 = scalar_lea.vmem %s1, 12
  %23 = vst [vmem:[%s22] sm:$0xf] %v21
  %s24 = scalar_lea.vmem %s1, 44
  %25 = vst [vmem:[%s24] sm:$0xf] %v21
  %s26 = scalar_lea.vmem %s0, 4
  %v27 = vld [vmem:[%s26] ss:$0 sm:$0xff]
  %s28 = scalar_lea.vmem %s1, 16
  %29 = vst [vmem:[%s28] sm:$0xf] %v27
  %s30 = scalar_lea.vmem %s1, 48
  %31 = vst [vmem:[%s30] sm:$0xf] %v27
  %s32 = scalar_lea.vmem %s0, 5
  %v33 = vld [vmem:[%s32] ss:$0 sm:$0xff]
  %s34 = scalar_lea.vmem %s1, 20
  %35 = vst [vmem:[%s34] sm:$0xf] %v33
  %s36 = scalar_lea.vmem %s1, 52
  %37 = vst [vmem:[%s36] sm:$0xf] %v33
  %s38 = scalar_lea.vmem %s0, 6
  %v39 = vld [vmem:[%s38] ss:$0 sm:$0xff]
  %s40 = scalar_lea.vmem %s1, 24
  %41 = vst [vmem:[%s40] sm:$0xf] %v39
  %s42 = scalar_lea.vmem %s1, 56
  %43 = vst [vmem:[%s42] sm:$0xf] %v39
  %s44 = scalar_lea.vmem %s0, 7
  %v45 = vld [vmem:[%s44] ss:$0 sm:$0xff]
  %s46 = scalar_lea.vmem %s1, 28
  %47 = vst [vmem:[%s46] sm:$0xf] %v45
  %s48 = scalar_lea.vmem %s1, 60
  %49 = vst [vmem:[%s48] sm:$0xf] %v45

// kernel: transformer_block.1
$region0: #{transformer_block.1}
  #allocation0 [shape = 'u32[]', space=smem, size = 0x4, offset = 0x4, fixed_abs, tag = 'smem constant byte address 0x4 - core index']
  #allocation1 [shape = 'u32[144,128]{1,0:T(1,128)}', space=vmem, size = 0x12000, scoped, tag = 'internal scratch']
  %s0 = inlined_call_operand.vmem [shape: f32[16,32], index: 0, kind: input, shape index: {}]
  %s1 = inlined_call_operand.vmem [shape: f32[32,288], index: 1, kind: input, shape index: {}]
  %s2 = inlined_call_operand.vmem [shape: f32[200,32], index: 2, kind: input, shape index: {}]
  %s3 = inlined_call_operand.hbm [shape: f32[16,32], index: 3, kind: output, shape index: {}]
  %s4 = sld [smem:[#allocation0]]
  $region22: #{transformer_block.1} parent=0
    _
  %s6 = ssub.s32 1, %s4
  %s7 = scalar_select 0, %s6, %s4
  $region1: #{transformer_block.1} parent=0
    #allocation2 [shape = 'u8[8192]{0}', space=vmem, size = 0x2000, scoped, tag = 'output window, operand 0, single buffered']
    #allocation3 [shape = 's32[1]{0}', space=sflag, size = 0x4, scoped, tag = 'scoped memory for transformer_block.1']
    %8 = vsyncpa [#allocation3], 0
    // Predicated region
    $region2: #{transformer_block.1} parent=1 // pred_check
      _
    $region3: #{transformer_block.1} parent=1 // pred_check_branch
      %10 = sbr.rel (0) target = $region5
    $region4: #{transformer_block.1} parent=1 // pred_region
      _
    $region5: #{transformer_block.1} parent=1 // pred_fallthru
      _
    // Predicated region
    $region6: #{transformer_block.1} parent=1 // pred_check
      _
    $region7: #{transformer_block.1} parent=1 // pred_check_branch
      %12 = sbr.rel (0) target = $region9
    $region8: #{transformer_block.1} parent=1 // pred_region
      _
    $region9: #{transformer_block.1} parent=1 // pred_fallthru
      _
    // Predicated region
    $region10: #{transformer_block.1} parent=1 // pred_check
      _
    $region11: #{transformer_block.1} parent=1 // pred_check_branch
      %14 = sbr.rel (0) target = $region13
    $region12: #{transformer_block.1} parent=1 // pred_region
      _
    $region13: #{transformer_block.1} parent=1 // pred_fallthru
      _
    %v15 = vld [vmem:[%s0] sm:$0xff]
    %v16 = vld [vmem:[%s0 + $0x8] sm:$0xff]
    %v17 = vld [vmem:[%s1] sm:$0xff]
    %v18 = vld [vmem:[%s1 + $0x18] sm:$0xff]
    %v19 = vld [vmem:[%s1 + $0x30] sm:$0xff]
    %v20 = vld [vmem:[%s1 + $0x48] sm:$0xff]
    %v21 = vld [vmem:[%s1 + $0x8] sm:$0xff]
    %v22 = vld [vmem:[%s1 + $0x10] sm:$0xff]
    %v23 = vld [vmem:[%s1 + $0x20] sm:$0xff]
    %v24 = vld [vmem:[%s1 + $0x28] sm:$0xff]
    %v25 = vld [vmem:[%s1 + $0x38] sm:$0xff]
    %v26 = vld [vmem:[%s1 + $0x40] sm:$0xff]
    %v27 = vld [vmem:[%s1 + $0x50] sm:$0xff]
    %v28 = vld [vmem:[%s1 + $0x58] sm:$0xff]
    %v29 = vld [vmem:[%s2] sm:$0xff]
    %v30 = vld [vmem:[%s2 + $0x8] sm:$0xff]
    %v31 = vld [vmem:[%s2 + $0x10] sm:$0xff]
    %v32 = vld [vmem:[%s2 + $0x18] sm:$0xff]
    %v33 = vld [vmem:[%s2 + $0x20] sm:$0xff]
    %v34 = vld [vmem:[%s2 + $0x28] sm:$0xff]
    %v35 = vld [vmem:[%s2 + $0x30] sm:$0xff]
    %v36 = vld [vmem:[%s2 + $0x38] sm:$0xff]
    %v37 = vld [vmem:[%s2 + $0x40] sm:$0xff]
    %v38 = vld [vmem:[%s2 + $0x48] sm:$0xff]
    %v39 = vld [vmem:[%s2 + $0x50] sm:$0xff]
    %v40 = vld [vmem:[%s2 + $0x58] sm:$0xff]
    %v41 = vld [vmem:[%s2 + $0x60] sm:$0xff]
    %v42 = vld [vmem:[%s2 + $0x68] sm:$0xff]
    %v43 = vld [vmem:[%s2 + $0x70] sm:$0xff]
    %v44 = vld [vmem:[%s2 + $0x78] sm:$0xff]
    %v45 = vld [vmem:[%s2 + $0x80] sm:$0xff]
    %v46 = vld [vmem:[%s2 + $0x88] sm:$0xff]
    %v47 = vld [vmem:[%s2 + $0x90] sm:$0xff]
    %v48 = vld [vmem:[%s2 + $0x98] sm:$0xff]
    %v49 = vld [vmem:[%s2 + $0xa0] sm:$0xff]
    %v50 = vld [vmem:[%s2 + $0xa8] sm:$0xff]
    %v51 = vld [vmem:[%s2 + $0xb0] sm:$0xff]
    %v52 = vld [vmem:[%s2 + $0xb8] sm:$0xff]
    %v53 = vld [vmem:[%s2 + $0xc0] sm:$0xff]
    %v54 = vmul.f32 %v15, %v15
    %v55 = vmul.f32 %v16, %v16
    %vm56 = vcmask 261120
    %v57 = vsel %vm56, %v54, 0.0
    %58 = vadd.xlane.f32.xlu0 %v57
    %v59 = vpop.xlane.xlu0 %58
    %v60 = vsel %vm56, %v55, 0.0
    %61 = vadd.xlane.f32.xlu0 %v60
    %v62 = vpop.xlane.xlu0 %61
    %v63 = vrcp.pop 32.0
    %v64 = vmul.f32 %v59, %v63
    %v65 = vmul.f32 %v62, %v63
    %v66 = vadd.f32 %v64, 1e-05
    %v67 = vadd.f32 %v65, 1e-05
    %v68 = vrsqrt.pop %v66
    %v69 = vrsqrt.pop %v67
    %v70 = vmul.f32 %v15, %v68
    %v71 = vmul.f32 %v16, %v69
    %v73 = vsel %vm56, %v70, 0
    %v76 = vsel %vm56, %v71, 0
    %78 = vmatprep.subr.mxu0 %v22
    %79 = vmatpush1.msra.mxu0 %v21
    %80 = vmatprep.subr.mxu0 %v24
    %81 = vmatpush1.msra.mxu0 %v23
    %82 = vmatprep.subr.mxu0 %v26
    %83 = vmatpush1.msra.mxu0 %v25
    %84 = vmatprep.subr.mxu0 %v28
    %85 = vmatpush1.msra.mxu0 %v27
    %86 = vmatprep.subr.mxu0 0.0
    %87 = vmatpush1.msra.mxu0 0.0
    %88 = vmatprep.subr.mxu0 0.0
    %89 = vmatpush1.msra.mxu0 0.0
    %90 = vmatprep.subr.mxu0 0.0
    %91 = vmatpush1.msra.mxu0 0.0
    %92 = vmatprep.subr.mxu0 0.0
    %93 = vmatpush1.msra.mxu0 0.0
    %94 = vmatprep.subr.mxu0 0.0
    %95 = vmatpush1.msra.mxu0 0.0
    %96 = vmatprep.subr.mxu0 0.0
    %97 = vmatpush1.msra.mxu0 0.0
    %98 = vmatprep.subr.mxu0 0.0
    %99 = vmatpush1.msra.mxu0 0.0
    %100 = vmatprep.subr.mxu0 0.0
    %101 = vmatpush1.msra.mxu0 0.0
    %102 = vmatprep.subr.mxu0 0.0
    %103 = vmatpush1.msra.mxu0 0.0
    %104 = vmatprep.subr.mxu0 0.0
    %105 = vmatpush1.msra.mxu0 0.0
    %106 = vmatprep.subr.mxu0 0.0
    %107 = vmatpush1.msra.mxu0 0.0
    %108 = vmatprep.subr.mxu0 0.0
    %109 = vmatpush1.msra.mxu0 0.0
    %110 = vmatprep.subr.mxu0 0.0
    %111 = vmatpush1.msra.mxu0 0.0
    %112 = vmatprep.subr.mxu0 0.0
    %113 = vmatpush1.msra.mxu0 0.0
    %114 = vmatprep.subr.mxu0 0.0
    %115 = vmatpush1.msra.mxu0 0.0
    %116 = vmatprep.subr.mxu0 0.0
    %117 = vmatpush1.msra.mxu0 0.0
    %118 = vmatprep.subr.mxu0 0.0
    %119 = vmatpush1.msra.mxu0 0.0
    %120 = vmatprep.subr.mxu0 0.0
    %121 = vmatpush1.msra.mxu0 0.0
    %122 = vmatprep.subr.mxu0 0.0
    %123 = vmatpush1.msra.mxu0 0.0
    %124 = vmatprep.subr.mxu0 0.0
    %125 = vmatpush1.msra.mxu0 0.0
    %126 = vmatprep.subr.mxu0 0.0
    %127 = vmatpush1.msra.mxu0 0.0
    %128 = vmatprep.subr.mxu0 0.0
    %129 = vmatpush1.msra.mxu0 0.0
    %130 = vmatprep.subr.mxu0 0.0
    %131 = vmatpush1.msra.mxu0 0.0
    %132 = vmatprep.subr.mxu0 0.0
    %133 = vmatpush1.msra.mxu0 0.0
    %134 = vmatprep.subr.mxu0 0.0
    %135 = vmatpush1.msra.mxu0 0.0
    %136 = vmatprep.subr.mxu0 0.0
    %137 = vmatpush1.msra.mxu0 0.0
    %138 = vmatprep.subr.mxu0 0.0
    %139 = vmatpush1.msra.mxu0 0.0
    %140 = vmatprep.subr.mxu0 0.0
    %141 = vmatpush1.msra.mxu0 0.0
    %142 = vmatprep.mubr.f32.mxu0 0.0
    %143 = vmatmul.mubr.f32.gmra.mrb[0].mxu0 %v73
    %v144 = vpop.f32.mrb[0].mxu0
    %v145 = vadd.f32 0.0, %v144
    %v146 = vpop.f32.mrb[0].mxu0
    %v147 = vadd.f32 0.0, %v146
    %148 = vmatprep.mubr.f32.mxu0 0.0
    %149 = vmatmul.mubr.f32.gmra.mrb[0].mxu0 %v76
    %v150 = vpop.f32.mrb[0].mxu0
    %v151 = vadd.f32 0.0, %v150
    %v152 = vpop.f32.mrb[0].mxu0
    %v153 = vadd.f32 0.0, %v152
    %154 = vdwg.mxu0
    %v155 = vmul.f32 %v145, %v29
    %v156 = vmul.f32 %v151, %v30
    %159 = vrot.lane.b32.xlu0 %v31, 96
    %v160 = vpop.permute.xlu0 %159
    %161 = vrot.lane.b32.xlu0 %v32, 96
    %v162 = vpop.permute.xlu0 %161
    %v165 = vmul.f32 %v145, %v160
    %v166 = vmul.f32 %v151, %v162
    %169 = vrot.lane.b32.xlu0 %v165, 32
    %v170 = vpop.permute.xlu0 %169
    %171 = vrot.lane.b32.xlu0 %v166, 32
    %v172 = vpop.permute.xlu0 %171
    %v175 = vadd.f32 %v155, %v170
    %v176 = vadd.f32 %v156, %v172
    %179 = vrot.lane.b32.xlu0 %v29, 32
    %v180 = vpop.permute.xlu0 %179
    %181 = vrot.lane.b32.xlu0 %v30, 32
    %v182 = vpop.permute.xlu0 %181
    %v185 = vmul.f32 %v145, %v180
    %v186 = vmul.f32 %v151, %v182
    %v187 = vmul.f32 %v147, %v31
    %v188 = vmul.f32 %v153, %v32
    %191 = vrot.lane.b32.xlu0 %v187, 32
    %v192 = vpop.permute.xlu0 %191
    %193 = vrot.lane.b32.xlu0 %v188, 32
    %v194 = vpop.permute.xlu0 %193
    %v197 = vadd.f32 %v185, %v192
    %v198 = vadd.f32 %v186, %v194
    %203 = vrot.lane.b32.xlu0 %v38, 32
    %v204 = vpop.permute.xlu0 %203
    %205 = vrot.lane.b32.xlu0 %v39, 32
    %v206 = vpop.permute.xlu0 %205
    %207 = vrot.lane.b32.xlu0 %v40, 32
    %v208 = vpop.permute.xlu0 %207
    %209 = vrot.lane.b32.xlu0 %v41, 32
    %v210 = vpop.permute.xlu0 %209
    %v215 = vmul.f32 %v197, %v204
    %v216 = vmul.f32 %v197, %v206
    %v217 = vmul.f32 %v197, %v208
    %v218 = vmul.f32 %v197, %v210
    %219 = vrot.lane.b32.xlu0 %v38, 64
    %v220 = vpop.permute.xlu0 %219
    %221 = vrot.lane.b32.xlu0 %v39, 64
    %v222 = vpop.permute.xlu0 %221
    %223 = vrot.lane.b32.xlu0 %v40, 64
    %v224 = vpop.permute.xlu0 %223
    %225 = vrot.lane.b32.xlu0 %v41, 64
    %v226 = vpop.permute.xlu0 %225
    %v231 = vmul.f32 %v145, %v220
    %v232 = vmul.f32 %v145, %v222
    %v233 = vmul.f32 %v145, %v224
    %v234 = vmul.f32 %v145, %v226
    %239 = vrot.lane.b32.xlu0 %v215, 96
    %v240 = vpop.permute.xlu0 %239
    %241 = vrot.lane.b32.xlu0 %v216, 96
    %v242 = vpop.permute.xlu0 %241
    %243 = vrot.lane.b32.xlu0 %v217, 96
    %v244 = vpop.permute.xlu0 %243
    %245 = vrot.lane.b32.xlu0 %v218, 96
    %v246 = vpop.permute.xlu0 %245
    %v248 = vsel %vm56, %v175, 0
    %v250 = vsel %vm56, %v240, 0
    %v252 = vsel %vm56, %v242, 0
    %v254 = vsel %vm56, %v244, 0
    %v256 = vsel %vm56, %v246, 0
    %258 = vmatprep.subr.mxu0 0.0
    %259 = vmatpush1.xpose.msra.mxu0 %v250
    %260 = vmatprep.subr.mxu0 0.0
    %261 = vmatpush1.xpose.msra.mxu0 %v252
    %262 = vmatprep.subr.mxu0 0.0
    %263 = vmatpush1.xpose.msra.mxu0 %v254
    %264 = vmatprep.subr.mxu0 0.0
    %265 = vmatpush1.xpose.msra.mxu0 %v256
    %266 = vmatprep.subr.mxu0 0.0
    %267 = vmatpush1.xpose.msra.mxu0 0.0
    %268 = vmatprep.subr.mxu0 0.0
    %269 = vmatpush1.xpose.msra.mxu0 0.0
    %270 = vmatprep.subr.mxu0 0.0
    %271 = vmatpush1.xpose.msra.mxu0 0.0
    %272 = vmatprep.subr.mxu0 0.0
    %273 = vmatpush1.xpose.msra.mxu0 0.0
    %274 = vmatprep.subr.mxu0 0.0
    %275 = vmatpush1.xpose.msra.mxu0 0.0
    %276 = vmatprep.subr.mxu0 0.0
    %277 = vmatpush1.xpose.msra.mxu0 0.0
    %278 = vmatprep.subr.mxu0 0.0
    %279 = vmatpush1.xpose.msra.mxu0 0.0
    %280 = vmatprep.subr.mxu0 0.0
    %281 = vmatpush1.xpose.msra.mxu0 0.0
    %282 = vmatprep.subr.mxu0 0.0
    %283 = vmatpush1.xpose.msra.mxu0 0.0
    %284 = vmatprep.subr.mxu0 0.0
    %285 = vmatpush1.xpose.msra.mxu0 0.0
    %286 = vmatprep.subr.mxu0 0.0
    %287 = vmatpush1.xpose.msra.mxu0 0.0
    %288 = vmatprep.subr.mxu0 0.0
    %289 = vmatpush1.xpose.msra.mxu0 0.0
    %290 = vmatprep.subr.mxu0 0.0
    %291 = vmatpush1.xpose.msra.mxu0 0.0
    %292 = vmatprep.subr.mxu0 0.0
    %293 = vmatpush1.xpose.msra.mxu0 0.0
    %294 = vmatprep.subr.mxu0 0.0
    %295 = vmatpush1.xpose.msra.mxu0 0.0
    %296 = vmatprep.subr.mxu0 0.0
    %297 = vmatpush1.xpose.msra.mxu0 0.0
    %298 = vmatprep.subr.mxu0 0.0
    %299 = vmatpush1.xpose.msra.mxu0 0.0
    %300 = vmatprep.subr.mxu0 0.0
    %301 = vmatpush1.xpose.msra.mxu0 0.0
    %302 = vmatprep.subr.mxu0 0.0
    %303 = vmatpush1.xpose.msra.mxu0 0.0
    %304 = vmatprep.subr.mxu0 0.0
    %305 = vmatpush1.xpose.msra.mxu0 0.0
    %306 = vmatprep.subr.mxu0 0.0
    %307 = vmatpush1.xpose.msra.mxu0 0.0
    %308 = vmatprep.subr.mxu0 0.0
    %309 = vmatpush1.xpose.msra.mxu0 0.0
    %310 = vmatprep.subr.mxu0 0.0
    %311 = vmatpush1.xpose.msra.mxu0 0.0
    %312 = vmatprep.subr.mxu0 0.0
    %313 = vmatpush1.xpose.msra.mxu0 0.0
    %314 = vmatprep.subr.mxu0 0.0
    %315 = vmatpush1.xpose.msra.mxu0 0.0
    %316 = vmatprep.subr.mxu0 0.0
    %317 = vmatpush1.xpose.msra.mxu0 0.0
    %318 = vmatprep.subr.mxu0 0.0
    %319 = vmatpush1.xpose.msra.mxu0 0.0
    %320 = vmatprep.subr.mxu0 0.0
    %321 = vmatpush1.xpose.msra.mxu0 0.0
    %322 = vmatprep.mubr.f32.mxu0 0.0
    %323 = vmatmul.mubr.f32.gmra.mrb[0].mxu0 %v248
    %v324 = vpop.f32.mrb[0].mxu0
    %v325 = vadd.f32 %v33, %v324
    %v326 = vpop.f32.mrb[0].mxu0
    %327 = vdwg.mxu0
    %vm328 = vcmask 64512
    %v329 = vsel %vm328, %v325, -inf
    %330 = vmax.xlane.f32.xlu0 %v329
    %v331 = vpop.xlane.xlu0 %330
    %vm332 = vcmask 130112
    %v333 = vsel %vm332, %v325, -inf
    %334 = vmax.xlane.f32.xlu0 %v333
    %v335 = vpop.xlane.xlu0 %334
    %vm336 = vcmask 195712
    %v337 = vsel %vm336, %v325, -inf
    %338 = vmax.xlane.f32.xlu0 %v337
    %v339 = vpop.xlane.xlu0 %338
    %vm340 = vcmask 261312
    %v341 = vsel %vm340, %v325, -inf
    %342 = vmax.xlane.f32.xlu0 %v341
    %v343 = vpop.xlane.xlu0 %342
    %v344 = vsel %vm328, %v331, %v335
    %vm345 = vcmask 130048
    %v346 = vsel %vm345, %v344, %v339
    %vm347 = vcmask 195584
    %v348 = vsel %vm347, %v346, %v343
    %v349 = vsub.f32 %v325, %v348
    %v350 = vmul.f32 %v349, 1.442695
    %v351 = vpow.pop %v350
    %v353 = vsel %vm56, %v351, 0
    %355 = vmatprep.subr.mxu0 0.0
    %356 = vmatpush1.msra.mxu0 %v42
    %357 = vmatprep.subr.mxu0 0.0
    %358 = vmatpush1.msra.mxu0 %v43
    %359 = vmatprep.subr.mxu0 0.0
    %360 = vmatpush1.msra.mxu0 %v44
    %361 = vmatprep.subr.mxu0 0.0
    %362 = vmatpush1.msra.mxu0 %v45
    %363 = vmatprep.subr.mxu0 0.0
    %364 = vmatpush1.msra.mxu0 0.0
    %365 = vmatprep.subr.mxu0 0.0
    %366 = vmatpush1.msra.mxu0 0.0
    %367 = vmatprep.subr.mxu0 0.0
    %368 = vmatpush1.msra.mxu0 0.0
    %369 = vmatprep.subr.mxu0 0.0
    %370 = vmatpush1.msra.mxu0 0.0
    %371 = vmatprep.subr.mxu0 0.0
    %372 = vmatpush1.msra.mxu0 0.0
    %373 = vmatprep.subr.mxu0 0.0
    %374 = vmatpush1.msra.mxu0 0.0
    %375 = vmatprep.subr.mxu0 0.0
    %376 = vmatpush1.msra.mxu0 0.0
    %377 = vmatprep.subr.mxu0 0.0
    %378 = vmatpush1.msra.mxu0 0.0
    %379 = vmatprep.subr.mxu0 0.0
    %380 = vmatpush1.msra.mxu0 0.0
    %381 = vmatprep.subr.mxu0 0.0
    %382 = vmatpush1.msra.mxu0 0.0
    %383 = vmatprep.subr.mxu0 0.0
    %384 = vmatpush1.msra.mxu0 0.0
    %385 = vmatprep.subr.mxu0 0.0
    %386 = vmatpush1.msra.mxu0 0.0
    %387 = vmatprep.subr.mxu0 0.0
    %388 = vmatpush1.msra.mxu0 0.0
    %389 = vmatprep.subr.mxu0 0.0
    %390 = vmatpush1.msra.mxu0 0.0
    %391 = vmatprep.subr.mxu0 0.0
    %392 = vmatpush1.msra.mxu0 0.0
    %393 = vmatprep.subr.mxu0 0.0
    %394 = vmatpush1.msra.mxu0 0.0
    %395 = vmatprep.subr.mxu0 0.0
    %396 = vmatpush1.msra.mxu0 0.0
    %397 = vmatprep.subr.mxu0 0.0
    %398 = vmatpush1.msra.mxu0 0.0
    %399 = vmatprep.subr.mxu0 0.0
    %400 = vmatpush1.msra.mxu0 0.0
    %401 = vmatprep.subr.mxu0 0.0
    %402 = vmatpush1.msra.mxu0 0.0
    %403 = vmatprep.subr.mxu0 0.0
    %404 = vmatpush1.msra.mxu0 0.0
    %405 = vmatprep.subr.mxu0 0.0
    %406 = vmatpush1.msra.mxu0 0.0
    %407 = vmatprep.subr.mxu0 0.0
    %408 = vmatpush1.msra.mxu0 0.0
    %409 = vmatprep.subr.mxu0 0.0
    %410 = vmatpush1.msra.mxu0 0.0
    %411 = vmatprep.subr.mxu0 0.0
    %412 = vmatpush1.msra.mxu0 0.0
    %413 = vmatprep.subr.mxu0 0.0
    %414 = vmatpush1.msra.mxu0 0.0
    %415 = vmatprep.subr.mxu0 0.0
    %416 = vmatpush1.msra.mxu0 0.0
    %417 = vmatprep.subr.mxu0 0.0
    %418 = vmatpush1.msra.mxu0 0.0
    %419 = vmatprep.mubr.f32.mxu0 0.0
    %420 = vmatmul.mubr.f32.gmra.mrb[0].mxu0 %v353
    %v421 = vpop.f32.mrb[0].mxu0
    %v422 = vadd.f32 0.0, %v421
    %v423 = vpop.f32.mrb[0].mxu0
    %424 = vdwg.mxu0
    %v425 = vrcp.pop %v422
    %v426 = vmul.f32 %v351, %v425
    %431 = vrot.lane.b32.xlu0 %v231, 64
    %v432 = vpop.permute.xlu0 %431
    %433 = vrot.lane.b32.xlu0 %v232, 64
    %v434 = vpop.permute.xlu0 %433
    %435 = vrot.lane.b32.xlu0 %v233, 64
    %v436 = vpop.permute.xlu0 %435
    %437 = vrot.lane.b32.xlu0 %v234, 64
    %v438 = vpop.permute.xlu0 %437
    %v444 = vsel %vm56, %v426, 0
    %446 = vmatprep.subr.mxu0 0.0
    %447 = vmatpush1.msra.mxu0 %v432
    %448 = vmatprep.subr.mxu0 0.0
    %449 = vmatpush1.msra.mxu0 %v434
    %450 = vmatprep.subr.mxu0 0.0
    %451 = vmatpush1.msra.mxu0 %v436
    %452 = vmatprep.subr.mxu0 0.0
    %453 = vmatpush1.msra.mxu0 %v438
    %454 = vmatprep.subr.mxu0 0.0
    %455 = vmatpush1.msra.mxu0 0.0
    %456 = vmatprep.subr.mxu0 0.0
    %457 = vmatpush1.msra.mxu0 0.0
    %458 = vmatprep.subr.mxu0 0.0
    %459 = vmatpush1.msra.mxu0 0.0
    %460 = vmatprep.subr.mxu0 0.0
    %461 = vmatpush1.msra.mxu0 0.0
    %462 = vmatprep.subr.mxu0 0.0
    %463 = vmatpush1.msra.mxu0 0.0
    %464 = vmatprep.subr.mxu0 0.0
    %465 = vmatpush1.msra.mxu0 0.0
    %466 = vmatprep.subr.mxu0 0.0
    %467 = vmatpush1.msra.mxu0 0.0
    %468 = vmatprep.subr.mxu0 0.0
    %469 = vmatpush1.msra.mxu0 0.0
    %470 = vmatprep.subr.mxu0 0.0
    %471 = vmatpush1.msra.mxu0 0.0
    %472 = vmatprep.subr.mxu0 0.0
    %473 = vmatpush1.msra.mxu0 0.0
    %474 = vmatprep.subr.mxu0 0.0
    %475 = vmatpush1.msra.mxu0 0.0
    %476 = vmatprep.subr.mxu0 0.0
    %477 = vmatpush1.msra.mxu0 0.0
    %478 = vmatprep.subr.mxu0 0.0
    %479 = vmatpush1.msra.mxu0 0.0
    %480 = vmatprep.subr.mxu0 0.0
    %481 = vmatpush1.msra.mxu0 0.0
    %482 = vmatprep.subr.mxu0 0.0
    %483 = vmatpush1.msra.mxu0 0.0
    %484 = vmatprep.subr.mxu0 0.0
    %485 = vmatpush1.msra.mxu0 0.0
    %486 = vmatprep.subr.mxu0 0.0
    %487 = vmatpush1.msra.mxu0 0.0
    %488 = vmatprep.subr.mxu0 0.0
    %489 = vmatpush1.msra.mxu0 0.0
    %490 = vmatprep.subr.mxu0 0.0
    %491 = vmatpush1.msra.mxu0 0.0
    %492 = vmatprep.subr.mxu0 0.0
    %493 = vmatpush1.msra.mxu0 0.0
    %494 = vmatprep.subr.mxu0 0.0
    %495 = vmatpush1.msra.mxu0 0.0
    %496 = vmatprep.subr.mxu0 0.0
    %497 = vmatpush1.msra.mxu0 0.0
    %498 = vmatprep.subr.mxu0 0.0
    %499 = vmatpush1.msra.mxu0 0.0
    %500 = vmatprep.subr.mxu0 0.0
    %501 = vmatpush1.msra.mxu0 0.0
    %502 = vmatprep.subr.mxu0 0.0
    %503 = vmatpush1.msra.mxu0 0.0
    %504 = vmatprep.subr.mxu0 0.0
    %505 = vmatpush1.msra.mxu0 0.0
    %506 = vmatprep.subr.mxu0 0.0
    %507 = vmatpush1.msra.mxu0 0.0
    %508 = vmatprep.subr.mxu0 0.0
    %509 = vmatpush1.msra.mxu0 0.0
    %510 = vmatprep.mubr.f32.mxu0 0.0
    %511 = vmatmul.mubr.f32.gmra.mrb[0].mxu0 %v444
    %v512 = vpop.f32.mrb[0].mxu0
    %v513 = vadd.f32 0.0, %v512
    %v514 = vpop.f32.mrb[0].mxu0
    %515 = vdwg.mxu0
    %v516 = vmul.f32 %v198, %v204
    %v517 = vmul.f32 %v198, %v206
    %v518 = vmul.f32 %v198, %v208
    %v519 = vmul.f32 %v198, %v210
    %v520 = vmul.f32 %v151, %v220
    %v521 = vmul.f32 %v151, %v222
    %v522 = vmul.f32 %v151, %v224
    %v523 = vmul.f32 %v151, %v226
    %528 = vrot.lane.b32.xlu0 %v516, 96
    %v529 = vpop.permute.xlu0 %528
    %530 = vrot.lane.b32.xlu0 %v517, 96
    %v531 = vpop.permute.xlu0 %530
    %532 = vrot.lane.b32.xlu0 %v518, 96
    %v533 = vpop.permute.xlu0 %532
    %534 = vrot.lane.b32.xlu0 %v519, 96
    %v535 = vpop.permute.xlu0 %534
    %v537 = vsel %vm56, %v176, 0
    %v539 = vsel %vm56, %v529, 0
    %v541 = vsel %vm56, %v531, 0
    %v543 = vsel %vm56, %v533, 0
    %v545 = vsel %vm56, %v535, 0
    %547 = vmatprep.subr.mxu0 0.0
    %548 = vmatpush1.xpose.msra.mxu0 %v539
    %549 = vmatprep.subr.mxu0 0.0
    %550 = vmatpush1.xpose.msra.mxu0 %v541
    %551 = vmatprep.subr.mxu0 0.0
    %552 = vmatpush1.xpose.msra.mxu0 %v543
    %553 = vmatprep.subr.mxu0 0.0
    %554 = vmatpush1.xpose.msra.mxu0 %v545
    %555 = vmatprep.subr.mxu0 0.0
    %556 = vmatpush1.xpose.msra.mxu0 0.0
    %557 = vmatprep.subr.mxu0 0.0
    %558 = vmatpush1.xpose.msra.mxu0 0.0
    %559 = vmatprep.subr.mxu0 0.0
    %560 = vmatpush1.xpose.msra.mxu0 0.0
    %561 = vmatprep.subr.mxu0 0.0
    %562 = vmatpush1.xpose.msra.mxu0 0.0
    %563 = vmatprep.subr.mxu0 0.0
    %564 = vmatpush1.xpose.msra.mxu0 0.0
    %565 = vmatprep.subr.mxu0 0.0
    %566 = vmatpush1.xpose.msra.mxu0 0.0
    %567 = vmatprep.subr.mxu0 0.0
    %568 = vmatpush1.xpose.msra.mxu0 0.0
    %569 = vmatprep.subr.mxu0 0.0
    %570 = vmatpush1.xpose.msra.mxu0 0.0
    %571 = vmatprep.subr.mxu0 0.0
    %572 = vmatpush1.xpose.msra.mxu0 0.0
    %573 = vmatprep.subr.mxu0 0.0
    %574 = vmatpush1.xpose.msra.mxu0 0.0
    %575 = vmatprep.subr.mxu0 0.0
    %576 = vmatpush1.xpose.msra.mxu0 0.0
    %577 = vmatprep.subr.mxu0 0.0
    %578 = vmatpush1.xpose.msra.mxu0 0.0
    %579 = vmatprep.subr.mxu0 0.0
    %580 = vmatpush1.xpose.msra.mxu0 0.0
    %581 = vmatprep.subr.mxu0 0.0
    %582 = vmatpush1.xpose.msra.mxu0 0.0
    %583 = vmatprep.subr.mxu0 0.0
    %584 = vmatpush1.xpose.msra.mxu0 0.0
    %585 = vmatprep.subr.mxu0 0.0
    %586 = vmatpush1.xpose.msra.mxu0 0.0
    %587 = vmatprep.subr.mxu0 0.0
    %588 = vmatpush1.xpose.msra.mxu0 0.0
    %589 = vmatprep.subr.mxu0 0.0
    %590 = vmatpush1.xpose.msra.mxu0 0.0
    %591 = vmatprep.subr.mxu0 0.0
    %592 = vmatpush1.xpose.msra.mxu0 0.0
    %593 = vmatprep.subr.mxu0 0.0
    %594 = vmatpush1.xpose.msra.mxu0 0.0
    %595 = vmatprep.subr.mxu0 0.0
    %596 = vmatpush1.xpose.msra.mxu0 0.0
    %597 = vmatprep.subr.mxu0 0.0
    %598 = vmatpush1.xpose.msra.mxu0 0.0
    %599 = vmatprep.subr.mxu0 0.0
    %600 = vmatpush1.xpose.msra.mxu0 0.0
    %601 = vmatprep.subr.mxu0 0.0
    %602 = vmatpush1.xpose.msra.mxu0 0.0
    %603 = vmatprep.subr.mxu0 0.0
    %604 = vmatpush1.xpose.msra.mxu0 0.0
    %605 = vmatprep.subr.mxu0 0.0
    %606 = vmatpush1.xpose.msra.mxu0 0.0
    %607 = vmatprep.subr.mxu0 0.0
    %608 = vmatpush1.xpose.msra.mxu0 0.0
    %609 = vmatprep.subr.mxu0 0.0
    %610 = vmatpush1.xpose.msra.mxu0 0.0
    %611 = vmatprep.mubr.f32.mxu0 0.0
    %612 = vmatmul.mubr.f32.gmra.mrb[0].mxu0 %v537
    %v613 = vpop.f32.mrb[0].mxu0
    %v614 = vadd.f32 %v33, %v613
    %v615 = vpop.f32.mrb[0].mxu0
    %616 = vdwg.mxu0
    %v617 = vsel %vm328, %v614, -inf
    %618 = vmax.xlane.f32.xlu0 %v617
    %v619 = vpop.xlane.xlu0 %618
    %v620 = vsel %vm332, %v614, -inf
    %621 = vmax.xlane.f32.xlu0 %v620
    %v622 = vpop.xlane.xlu0 %621
    %v623 = vsel %vm336, %v614, -inf
    %624 = vmax.xlane.f32.xlu0 %v623
    %v625 = vpop.xlane.xlu0 %624
    %v626 = vsel %vm340, %v614, -inf
    %627 = vmax.xlane.f32.xlu0 %v626
    %v628 = vpop.xlane.xlu0 %627
    %v629 = vsel %vm328, %v619, %v622
    %v630 = vsel %vm345, %v629, %v625
    %v631 = vsel %vm347, %v630, %v628
    %v632 = vsub.f32 %v614, %v631
    %v633 = vmul.f32 %v632, 1.442695
    %v634 = vpow.pop %v633
    %v636 = vsel %vm56, %v634, 0
    %638 = vmatprep.subr.mxu0 0.0
    %639 = vmatpush1.msra.mxu0 %v42
    %640 = vmatprep.subr.mxu0 0.0
    %641 = vmatpush1.msra.mxu0 %v43
    %642 = vmatprep.subr.mxu0 0.0
    %643 = vmatpush1.msra.mxu0 %v44
    %644 = vmatprep.subr.mxu0 0.0
    %645 = vmatpush1.msra.mxu0 %v45
    %646 = vmatprep.subr.mxu0 0.0
    %647 = vmatpush1.msra.mxu0 0.0
    %648 = vmatprep.subr.mxu0 0.0
    %649 = vmatpush1.msra.mxu0 0.0
    %650 = vmatprep.subr.mxu0 0.0
    %651 = vmatpush1.msra.mxu0 0.0
    %652 = vmatprep.subr.mxu0 0.0
    %653 = vmatpush1.msra.mxu0 0.0
    %654 = vmatprep.subr.mxu0 0.0
    %655 = vmatpush1.msra.mxu0 0.0
    %656 = vmatprep.subr.mxu0 0.0
    %657 = vmatpush1.msra.mxu0 0.0
    %658 = vmatprep.subr.mxu0 0.0
    %659 = vmatpush1.msra.mxu0 0.0
    %660 = vmatprep.subr.mxu0 0.0
    %661 = vmatpush1.msra.mxu0 0.0
    %662 = vmatprep.subr.mxu0 0.0
    %663 = vmatpush1.msra.mxu0 0.0
    %664 = vmatprep.subr.mxu0 0.0
    %665 = vmatpush1.msra.mxu0 0.0
    %666 = vmatprep.subr.mxu0 0.0
    %667 = vmatpush1.msra.mxu0 0.0
    %668 = vmatprep.subr.mxu0 0.0
    %669 = vmatpush1.msra.mxu0 0.0
    %670 = vmatprep.subr.mxu0 0.0
    %671 = vmatpush1.msra.mxu0 0.0
    %672 = vmatprep.subr.mxu0 0.0
    %673 = vmatpush1.msra.mxu0 0.0
    %674 = vmatprep.subr.mxu0 0.0
    %675 = vmatpush1.msra.mxu0 0.0
    %676 = vmatprep.subr.mxu0 0.0
    %677 = vmatpush1.msra.mxu0 0.0
    %678 = vmatprep.subr.mxu0 0.0
    %679 = vmatpush1.msra.mxu0 0.0
    %680 = vmatprep.subr.mxu0 0.0
    %681 = vmatpush1.msra.mxu0 0.0
    %682 = vmatprep.subr.mxu0 0.0
    %683 = vmatpush1.msra.mxu0 0.0
    %684 = vmatprep.subr.mxu0 0.0
    %685 = vmatpush1.msra.mxu0 0.0
    %686 = vmatprep.subr.mxu0 0.0
    %687 = vmatpush1.msra.mxu0 0.0
    %688 = vmatprep.subr.mxu0 0.0
    %689 = vmatpush1.msra.mxu0 0.0
    %690 = vmatprep.subr.mxu0 0.0
    %691 = vmatpush1.msra.mxu0 0.0
    %692 = vmatprep.subr.mxu0 0.0
    %693 = vmatpush1.msra.mxu0 0.0
    %694 = vmatprep.subr.mxu0 0.0
    %695 = vmatpush1.msra.mxu0 0.0
    %696 = vmatprep.subr.mxu0 0.0
    %697 = vmatpush1.msra.mxu0 0.0
    %698 = vmatprep.subr.mxu0 0.0
    %699 = vmatpush1.msra.mxu0 0.0
    %700 = vmatprep.subr.mxu0 0.0
    %701 = vmatpush1.msra.mxu0 0.0
    %702 = vmatprep.mubr.f32.mxu0 0.0
    %703 = vmatmul.mubr.f32.gmra.mrb[0].mxu0 %v636
    %v704 = vpop.f32.mrb[0].mxu0
    %v705 = vadd.f32 0.0, %v704
    %v706 = vpop.f32.mrb[0].mxu0
    %707 = vdwg.mxu0
    %v708 = vrcp.pop %v705
    %v709 = vmul.f32 %v634, %v708
    %714 = vrot.lane.b32.xlu0 %v520, 64
    %v715 = vpop.permute.xlu0 %714
    %716 = vrot.lane.b32.xlu0 %v521, 64
    %v717 = vpop.permute.xlu0 %716
    %718 = vrot.lane.b32.xlu0 %v522, 64
    %v719 = vpop.permute.xlu0 %718
    %720 = vrot.lane.b32.xlu0 %v523, 64
    %v721 = vpop.permute.xlu0 %720
    %v727 = vsel %vm56, %v709, 0
    %729 = vmatprep.subr.mxu0 0.0
    %730 = vmatpush1.msra.mxu0 %v715
    %731 = vmatprep.subr.mxu0 0.0
    %732 = vmatpush1.msra.mxu0 %v717
    %733 = vmatprep.subr.mxu0 0.0
    %734 = vmatpush1.msra.mxu0 %v719
    %735 = vmatprep.subr.mxu0 0.0
    %736 = vmatpush1.msra.mxu0 %v721
    %737 = vmatprep.subr.mxu0 0.0
    %738 = vmatpush1.msra.mxu0 0.0
    %739 = vmatprep.subr.mxu0 0.0
    %740 = vmatpush1.msra.mxu0 0.0
    %741 = vmatprep.subr.mxu0 0.0
    %742 = vmatpush1.msra.mxu0 0.0
    %743 = vmatprep.subr.mxu0 0.0
    %744 = vmatpush1.msra.mxu0 0.0
    %745 = vmatprep.subr.mxu0 0.0
    %746 = vmatpush1.msra.mxu0 0.0
    %747 = vmatprep.subr.mxu0 0.0
    %748 = vmatpush1.msra.mxu0 0.0
    %749 = vmatprep.subr.mxu0 0.0
    %750 = vmatpush1.msra.mxu0 0.0
    %751 = vmatprep.subr.mxu0 0.0
    %752 = vmatpush1.msra.mxu0 0.0
    %753 = vmatprep.subr.mxu0 0.0
    %754 = vmatpush1.msra.mxu0 0.0
    %755 = vmatprep.subr.mxu0 0.0
    %756 = vmatpush1.msra.mxu0 0.0
    %757 = vmatprep.subr.mxu0 0.0
    %758 = vmatpush1.msra.mxu0 0.0
    %759 = vmatprep.subr.mxu0 0.0
    %760 = vmatpush1.msra.mxu0 0.0
    %761 = vmatprep.subr.mxu0 0.0
    %762 = vmatpush1.msra.mxu0 0.0
    %763 = vmatprep.subr.mxu0 0.0
    %764 = vmatpush1.msra.mxu0 0.0
    %765 = vmatprep.subr.mxu0 0.0
    %766 = vmatpush1.msra.mxu0 0.0
    %767 = vmatprep.subr.mxu0 0.0
    %768 = vmatpush1.msra.mxu0 0.0
    %769 = vmatprep.subr.mxu0 0.0
    %770 = vmatpush1.msra.mxu0 0.0
    %771 = vmatprep.subr.mxu0 0.0
    %772 = vmatpush1.msra.mxu0 0.0
    %773 = vmatprep.subr.mxu0 0.0
    %774 = vmatpush1.msra.mxu0 0.0
    %775 = vmatprep.subr.mxu0 0.0
    %776 = vmatpush1.msra.mxu0 0.0
    %777 = vmatprep.subr.mxu0 0.0
    %778 = vmatpush1.msra.mxu0 0.0
    %779 = vmatprep.subr.mxu0 0.0
    %780 = vmatpush1.msra.mxu0 0.0
    %781 = vmatprep.subr.mxu0 0.0
    %782 = vmatpush1.msra.mxu0 0.0
    %783 = vmatprep.subr.mxu0 0.0
    %784 = vmatpush1.msra.mxu0 0.0
    %785 = vmatprep.subr.mxu0 0.0
    %786 = vmatpush1.msra.mxu0 0.0
    %787 = vmatprep.subr.mxu0 0.0
    %788 = vmatpush1.msra.mxu0 0.0
    %789 = vmatprep.subr.mxu0 0.0
    %790 = vmatpush1.msra.mxu0 0.0
    %791 = vmatprep.subr.mxu0 0.0
    %792 = vmatpush1.msra.mxu0 0.0
    %793 = vmatprep.mubr.f32.mxu0 0.0
    %794 = vmatmul.mubr.f32.gmra.mrb[0].mxu0 %v727
    %v795 = vpop.f32.mrb[0].mxu0
    %v796 = vadd.f32 0.0, %v795
    %v797 = vpop.f32.mrb[0].mxu0
    %798 = vdwg.mxu0
    %v800 = vsel %vm56, %v513, 0
    %v803 = vsel %vm56, %v796, 0
    %805 = vmatprep.subr.mxu0 0.0
    %806 = vmatpush1.msra.mxu0 %v34
    %807 = vmatprep.subr.mxu0 0.0
    %808 = vmatpush1.msra.mxu0 %v35
    %809 = vmatprep.subr.mxu0 0.0
    %810 = vmatpush1.msra.mxu0 %v36
    %811 = vmatprep.subr.mxu0 0.0
    %812 = vmatpush1.msra.mxu0 %v37
    %813 = vmatprep.subr.mxu0 0.0
    %814 = vmatpush1.msra.mxu0 0.0
    %815 = vmatprep.subr.mxu0 0.0
    %816 = vmatpush1.msra.mxu0 0.0
    %817 = vmatprep.subr.mxu0 0.0
    %818 = vmatpush1.msra.mxu0 0.0
    %819 = vmatprep.subr.mxu0 0.0
    %820 = vmatpush1.msra.mxu0 0.0
    %821 = vmatprep.subr.mxu0 0.0
    %822 = vmatpush1.msra.mxu0 0.0
    %823 = vmatprep.subr.mxu0 0.0
    %824 = vmatpush1.msra.mxu0 0.0
    %825 = vmatprep.subr.mxu0 0.0
    %826 = vmatpush1.msra.mxu0 0.0
    %827 = vmatprep.subr.mxu0 0.0
    %828 = vmatpush1.msra.mxu0 0.0
    %829 = vmatprep.subr.mxu0 0.0
    %830 = vmatpush1.msra.mxu0 0.0
    %831 = vmatprep.subr.mxu0 0.0
    %832 = vmatpush1.msra.mxu0 0.0
    %833 = vmatprep.subr.mxu0 0.0
    %834 = vmatpush1.msra.mxu0 0.0
    %835 = vmatprep.subr.mxu0 0.0
    %836 = vmatpush1.msra.mxu0 0.0
    %837 = vmatprep.subr.mxu0 0.0
    %838 = vmatpush1.msra.mxu0 0.0
    %839 = vmatprep.subr.mxu0 0.0
    %840 = vmatpush1.msra.mxu0 0.0
    %841 = vmatprep.subr.mxu0 0.0
    %842 = vmatpush1.msra.mxu0 0.0
    %843 = vmatprep.subr.mxu0 0.0
    %844 = vmatpush1.msra.mxu0 0.0
    %845 = vmatprep.subr.mxu0 0.0
    %846 = vmatpush1.msra.mxu0 0.0
    %847 = vmatprep.subr.mxu0 0.0
    %848 = vmatpush1.msra.mxu0 0.0
    %849 = vmatprep.subr.mxu0 0.0
    %850 = vmatpush1.msra.mxu0 0.0
    %851 = vmatprep.subr.mxu0 0.0
    %852 = vmatpush1.msra.mxu0 0.0
    %853 = vmatprep.subr.mxu0 0.0
    %854 = vmatpush1.msra.mxu0 0.0
    %855 = vmatprep.subr.mxu0 0.0
    %856 = vmatpush1.msra.mxu0 0.0
    %857 = vmatprep.subr.mxu0 0.0
    %858 = vmatpush1.msra.mxu0 0.0
    %859 = vmatprep.subr.mxu0 0.0
    %860 = vmatpush1.msra.mxu0 0.0
    %861 = vmatprep.subr.mxu0 0.0
    %862 = vmatpush1.msra.mxu0 0.0
    %863 = vmatprep.subr.mxu0 0.0
    %864 = vmatpush1.msra.mxu0 0.0
    %865 = vmatprep.subr.mxu0 0.0
    %866 = vmatpush1.msra.mxu0 0.0
    %867 = vmatprep.subr.mxu0 0.0
    %868 = vmatpush1.msra.mxu0 0.0
    %869 = vmatprep.mubr.f32.mxu0 0.0
    %870 = vmatmul.mubr.f32.gmra.mrb[0].mxu0 %v800
    %v871 = vpop.f32.mrb[0].mxu0
    %v872 = vadd.f32 0.0, %v871
    %v873 = vpop.f32.mrb[0].mxu0
    %874 = vmatprep.mubr.f32.mxu0 0.0
    %875 = vmatmul.mubr.f32.gmra.mrb[0].mxu0 %v803
    %v876 = vpop.f32.mrb[0].mxu0
    %v877 = vadd.f32 0.0, %v876
    %v878 = vpop.f32.mrb[0].mxu0
    %879 = vdwg.mxu0
    %v880 = vadd.f32 %v15, %v872
    %v881 = vadd.f32 %v16, %v877
    %v882 = vmul.f32 %v880, %v880
    %v883 = vmul.f32 %v881, %v881
    %v884 = vsel %vm56, %v882, 0.0
    %885 = vadd.xlane.f32.xlu0 %v884
    %v886 = vpop.xlane.xlu0 %885
    %v887 = vsel %vm56, %v883, 0.0
    %888 = vadd.xlane.f32.xlu0 %v887
    %v889 = vpop.xlane.xlu0 %888
    %v890 = vmul.f32 %v886, %v63
    %v891 = vmul.f32 %v889, %v63
    %v892 = vadd.f32 %v890, 1e-05
    %v893 = vadd.f32 %v891, 1e-05
    %v894 = vrsqrt.pop %v892
    %v895 = vrsqrt.pop %v893
    %v896 = vmul.f32 %v880, %v894
    %v897 = vmul.f32 %v881, %v895
    %v899 = vsel %vm56, %v896, 0
    %v902 = vsel %vm56, %v897, 0
    %904 = vmatprep.subr.mxu0 0.0
    %905 = vmatpush1.msra.mxu0 %v17
    %906 = vmatprep.subr.mxu0 0.0
    %907 = vmatpush1.msra.mxu0 %v18
    %908 = vmatprep.subr.mxu0 0.0
    %909 = vmatpush1.msra.mxu0 %v19
    %910 = vmatprep.subr.mxu0 0.0
    %911 = vmatpush1.msra.mxu0 %v20
    %912 = vmatprep.subr.mxu0 0.0
    %913 = vmatpush1.msra.mxu0 0.0
    %914 = vmatprep.subr.mxu0 0.0
    %915 = vmatpush1.msra.mxu0 0.0
    %916 = vmatprep.subr.mxu0 0.0
    %917 = vmatpush1.msra.mxu0 0.0
    %918 = vmatprep.subr.mxu0 0.0
    %919 = vmatpush1.msra.mxu0 0.0
    %920 = vmatprep.subr.mxu0 0.0
    %921 = vmatpush1.msra.mxu0 0.0
    %922 = vmatprep.subr.mxu0 0.0
    %923 = vmatpush1.msra.mxu0 0.0
    %924 = vmatprep.subr.mxu0 0.0
    %925 = vmatpush1.msra.mxu0 0.0
    %926 = vmatprep.subr.mxu0 0.0
    %927 = vmatpush1.msra.mxu0 0.0
    %928 = vmatprep.subr.mxu0 0.0
    %929 = vmatpush1.msra.mxu0 0.0
    %930 = vmatprep.subr.mxu0 0.0
    %931 = vmatpush1.msra.mxu0 0.0
    %932 = vmatprep.subr.mxu0 0.0
    %933 = vmatpush1.msra.mxu0 0.0
    %934 = vmatprep.subr.mxu0 0.0
    %935 = vmatpush1.msra.mxu0 0.0
    %936 = vmatprep.subr.mxu0 0.0
    %937 = vmatpush1.msra.mxu0 0.0
    %938 = vmatprep.subr.mxu0 0.0
    %939 = vmatpush1.msra.mxu0 0.0
    %940 = vmatprep.subr.mxu0 0.0
    %941 = vmatpush1.msra.mxu0 0.0
    %942 = vmatprep.subr.mxu0 0.0
    %943 = vmatpush1.msra.mxu0 0.0
    %944 = vmatprep.subr.mxu0 0.0
    %945 = vmatpush1.msra.mxu0 0.0
    %946 = vmatprep.subr.mxu0 0.0
    %947 = vmatpush1.msra.mxu0 0.0
    %948 = vmatprep.subr.mxu0 0.0
    %949 = vmatpush1.msra.mxu0 0.0
    %950 = vmatprep.subr.mxu0 0.0
    %951 = vmatpush1.msra.mxu0 0.0
    %952 = vmatprep.subr.mxu0 0.0
    %953 = vmatpush1.msra.mxu0 0.0
    %954 = vmatprep.subr.mxu0 0.0
    %955 = vmatpush1.msra.mxu0 0.0
    %956 = vmatprep.subr.mxu0 0.0
    %957 = vmatpush1.msra.mxu0 0.0
    %958 = vmatprep.subr.mxu0 0.0
    %959 = vmatpush1.msra.mxu0 0.0
    %960 = vmatprep.subr.mxu0 0.0
    %961 = vmatpush1.msra.mxu0 0.0
    %962 = vmatprep.subr.mxu0 0.0
    %963 = vmatpush1.msra.mxu0 0.0
    %964 = vmatprep.subr.mxu0 0.0
    %965 = vmatpush1.msra.mxu0 0.0
    %966 = vmatprep.subr.mxu0 0.0
    %967 = vmatpush1.msra.mxu0 0.0
    %968 = vmatprep.mubr.f32.mxu0 0.0
    %969 = vmatmul.mubr.f32.gmra.mrb[0].mxu0 %v899
    %v970 = vpop.f32.mrb[0].mxu0
    %v971 = vadd.f32 0.0, %v970
    %v972 = vpop.f32.mrb[0].mxu0
    %973 = vmatprep.mubr.f32.mxu0 0.0
    %974 = vmatmul.mubr.f32.gmra.mrb[0].mxu0 %v902
    %v975 = vpop.f32.mrb[0].mxu0
    %v976 = vadd.f32 0.0, %v975
    %v977 = vpop.f32.mrb[0].mxu0
    %978 = vdwg.mxu0
    %v979 = vxor.u32 %v971, 2147483648
    %v980 = vxor.u32 %v976, 2147483648
    %v981 = vmul.f32 %v979, 1.442695
    %v982 = vpow.pop %v981
    %v983 = vmul.f32 %v980, 1.442695
    %v984 = vpow.pop %v983
    %v985 = vadd.f32 %v982, 1.0
    %v986 = vadd.f32 %v984, 1.0
    %v987 = vrcp.pop %v985
    %v988 = vmul.f32 1.0, %v987
    %v989 = vrcp.pop %v986
    %v990 = vmul.f32 1.0, %v989
    %v991 = vmul.f32 %v971, %v988
    %v992 = vmul.f32 %v976, %v990
    %995 = vrot.lane.b32.xlu0 %v971, 64
    %v996 = vpop.permute.xlu0 %995
    %997 = vrot.lane.b32.xlu0 %v976, 64
    %v998 = vpop.permute.xlu0 %997
    %v1001 = vmul.f32 %v991, %v996
    %v1002 = vmul.f32 %v992, %v998
    %vm1003 = vcmask 523264
    %v1005 = vsel %vm1003, %v1001, 0
    %v1008 = vsel %vm1003, %v1002, 0
    %1010 = vmatprep.subr.mxu0 0.0
    %1011 = vmatpush1.msra.mxu0 %v46
    %1012 = vmatprep.subr.mxu0 0.0
    %1013 = vmatpush1.msra.mxu0 %v47
    %1014 = vmatprep.subr.mxu0 0.0
    %1015 = vmatpush1.msra.mxu0 %v48
    %1016 = vmatprep.subr.mxu0 0.0
    %1017 = vmatpush1.msra.mxu0 %v49
    %1018 = vmatprep.subr.mxu0 0.0
    %1019 = vmatpush1.msra.mxu0 %v50
    %1020 = vmatprep.subr.mxu0 0.0
    %1021 = vmatpush1.msra.mxu0 %v51
    %1022 = vmatprep.subr.mxu0 0.0
    %1023 = vmatpush1.msra.mxu0 %v52
    %1024 = vmatprep.subr.mxu0 0.0
    %1025 = vmatpush1.msra.mxu0 %v53
    %1026 = vmatprep.subr.mxu0 0.0
    %1027 = vmatpush1.msra.mxu0 0.0
    %1028 = vmatprep.subr.mxu0 0.0
    %1029 = vmatpush1.msra.mxu0 0.0
    %1030 = vmatprep.subr.mxu0 0.0
    %1031 = vmatpush1.msra.mxu0 0.0
    %1032 = vmatprep.subr.mxu0 0.0
    %1033 = vmatpush1.msra.mxu0 0.0
    %1034 = vmatprep.subr.mxu0 0.0
    %1035 = vmatpush1.msra.mxu0 0.0
    %1036 = vmatprep.subr.mxu0 0.0
    %1037 = vmatpush1.msra.mxu0 0.0
    %1038 = vmatprep.subr.mxu0 0.0
    %1039 = vmatpush1.msra.mxu0 0.0
    %1040 = vmatprep.subr.mxu0 0.0
    %1041 = vmatpush1.msra.mxu0 0.0
    %1042 = vmatprep.subr.mxu0 0.0
    %1043 = vmatpush1.msra.mxu0 0.0
    %1044 = vmatprep.subr.mxu0 0.0
    %1045 = vmatpush1.msra.mxu0 0.0
    %1046 = vmatprep.subr.mxu0 0.0
    %1047 = vmatpush1.msra.mxu0 0.0
    %1048 = vmatprep.subr.mxu0 0.0
    %1049 = vmatpush1.msra.mxu0 0.0
    %1050 = vmatprep.subr.mxu0 0.0
    %1051 = vmatpush1.msra.mxu0 0.0
    %1052 = vmatprep.subr.mxu0 0.0
    %1053 = vmatpush1.msra.mxu0 0.0
    %1054 = vmatprep.subr.mxu0 0.0
    %1055 = vmatpush1.msra.mxu0 0.0
    %1056 = vmatprep.subr.mxu0 0.0
    %1057 = vmatpush1.msra.mxu0 0.0
    %1058 = vmatprep.subr.mxu0 0.0
    %1059 = vmatpush1.msra.mxu0 0.0
    %1060 = vmatprep.subr.mxu0 0.0
    %1061 = vmatpush1.msra.mxu0 0.0
    %1062 = vmatprep.subr.mxu0 0.0
    %1063 = vmatpush1.msra.mxu0 0.0
    %1064 = vmatprep.subr.mxu0 0.0
    %1065 = vmatpush1.msra.mxu0 0.0
    %1066 = vmatprep.subr.mxu0 0.0
    %1067 = vmatpush1.msra.mxu0 0.0
    %1068 = vmatprep.subr.mxu0 0.0
    %1069 = vmatpush1.msra.mxu0 0.0
    %1070 = vmatprep.subr.mxu0 0.0
    %1071 = vmatpush1.msra.mxu0 0.0
    %1072 = vmatprep.subr.mxu0 0.0
    %1073 = vmatpush1.msra.mxu0 0.0
    %1074 = vmatprep.mubr.f32.mxu0 0.0
    %1075 = vmatmul.mubr.f32.gmra.mrb[0].mxu0 %v1005
    %v1076 = vpop.f32.mrb[0].mxu0
    %v1077 = vadd.f32 0.0, %v1076
    %v1078 = vpop.f32.mrb[0].mxu0
    %1079 = vmatprep.mubr.f32.mxu0 0.0
    %1080 = vmatmul.mubr.f32.gmra.mrb[0].mxu0 %v1008
    %v1081 = vpop.f32.mrb[0].mxu0
    %v1082 = vadd.f32 0.0, %v1081
    %v1083 = vpop.f32.mrb[0].mxu0
    %1084 = vdwg.mxu0
    %v1085 = vadd.f32 %v880, %v1077
    %v1086 = vadd.f32 %v881, %v1082
    %1087 = vst.msk [vmem:[#allocation2] sm:$0xff] %vm56, %v1085
    %1088 = vst.msk [vmem:[#allocation2 + $0x8] sm:$0xff] %vm56, %v1086
    // Predicated region
    $region14: #{transformer_block.1} parent=1 // pred_check
      _
    $region15: #{transformer_block.1} parent=1 // pred_check_branch
      %1090 = sbr.rel (0) target = $region17
    $region16: #{transformer_block.1} parent=1 // pred_region
      %s1092 = ssub.s32 256, 256
      %1093 = vsyncadd [#allocation3], %s1092
      %s1094 = sshll.u32 [#allocation2], 4
      %s1095 = int_to_ptr.vmem [resolvable:$true] %s1094
      %1100 = dma.vmem_to_hbm [thread:$0]  %s1095, 256, %s3, [#allocation3], 128, 128, 8
    $region17: #{transformer_block.1} parent=1 // pred_fallthru
      _
    // Predicated region
    $region18: #{transformer_block.1} parent=1 // pred_check
      _
    $region19: #{transformer_block.1} parent=1 // pred_check_branch
      %1102 = sbr.rel (0) target = $region21
    $region20: #{transformer_block.1} parent=1 // pred_region
      %1103 = dma.done [#allocation3], 256
    $region21: #{transformer_block.1} parent=1 // pred_fallthru
      _
    %1104 = vsyncpa [#allocation3], 1

</llo_original>
